<compile_context>
chip_gen: v5e
topology: v5e:2x2
jax: 0.10.0
libtpu: 0.0.40
codegen_flags: <defaults>
</compile_context>

<pallas_src>
import jax
import jax.numpy as jnp
from jax.experimental import pallas as pl
from jax.experimental.pallas import tpu as pltpu


def _linear_relu_kernel(x_ref, wt_ref, b_ref, o_ref):
    # x_ref : (B, F_in)      f32, VMEM
    # wt_ref: (F_out, F_in)  f32, VMEM (lane-dense transposed weight)
    # b_ref : (F_out,)       f32, SMEM (scalar reads)
    # o_ref : (B, F_out)     f32, VMEM
    y = jax.lax.dot_general(
        x_ref[...],
        wt_ref[...],
        dimension_numbers=(((1,), (1,)), ((), ())),   # contract F_in with F_in -> x @ W
        preferred_element_type=jnp.float32,
    )

    # Build the (B, F_out) bias tile from SMEM scalars.  F_out is tiny and
    # static, so this unrolls to a couple of select ops on the VPU.
    f_out = o_ref.shape[-1]
    cols = jax.lax.broadcasted_iota(jnp.int32, y.shape, 1)
    bias = jnp.full(y.shape, b_ref[f_out - 1], dtype=jnp.float32)
    for j in range(f_out - 1):
        bias = jnp.where(cols == j, b_ref[j], bias)

    o_ref[...] = jnp.maximum(y + bias, 0.0).astype(o_ref.dtype)


@jax.jit
def teacher_forward(x, w_t, b):
    """x: (B, F_in) f32, w_t: (F_out, F_in) f32, b: (F_out,) f32 -> (B, F_out) f32."""
    B, _ = x.shape
    F_out = w_t.shape[0]
    return pl.pallas_call(
        _linear_relu_kernel,
        out_shape=jax.ShapeDtypeStruct((B, F_out), jnp.float32),
        # No grid: whole arrays resident in VMEM once; no pipeline machinery.
        in_specs=[
            pl.BlockSpec(memory_space=pltpu.MemorySpace.VMEM),   # x
            pl.BlockSpec(memory_space=pltpu.MemorySpace.VMEM),   # W^T (lane-dense)
            pl.BlockSpec(memory_space=pltpu.MemorySpace.SMEM),   # bias (scalars)
        ],
        out_specs=pl.BlockSpec(memory_space=pltpu.MemorySpace.VMEM),
    )(x, w_t, b)


def make_params(key, f_in=400, f_out=2):
    """Deterministic init mimicking nn.Linear's default uniform(-1/sqrt(fan_in), +).

    Weight is created directly in the lane-dense (F_out, F_in) layout the kernel
    consumes (transpose done once here, never in the hot path).
    """
    kw, kb = jax.random.split(key)
    bound = 1.0 / jnp.sqrt(jnp.float32(f_in))
    w_t = jax.random.uniform(kw, (f_out, f_in), jnp.float32, -bound, bound)
    b = jax.random.uniform(kb, (f_out,), jnp.float32, -bound, bound)
    return w_t, b


if __name__ == "__main__":
    key = jax.random.PRNGKey(0)
    kx, kp = jax.random.split(key)

    # Matches the PyTorch toy: x = torch.randn(2, 400), Linear(400, 2), ReLU.
    B, F_IN, F_OUT = 2, 400, 2
    x = jax.random.normal(kx, (B, F_IN), dtype=jnp.float32)
    w_t, b = make_params(kp, F_IN, F_OUT)

    out = teacher_forward(x, w_t, b)
    out = jax.block_until_ready(out)

    # Cross-check against plain JAX reference (same math as nn.Linear + relu).
    ref = jnp.maximum(x @ w_t.T + b[None, :], 0.0)
    assert out.shape == (B, F_OUT)
    assert jnp.allclose(out, ref, atol=1e-5, rtol=1e-5)

    print("KERNEL_OK")
</pallas_src>

<mosaic_0001>
module attributes {stable_mosaic.version = 11 : i64} {
  func.func @_linear_relu_kernel(%arg0: memref<2x400xf32, #tpu.memory_space<vmem>>, %arg1: memref<2x400xf32, #tpu.memory_space<vmem>>, %arg2: memref<2xf32, #tpu.memory_space<smem>>, %arg3: memref<2x2xf32, #tpu.memory_space<vmem>>) attributes {dimension_semantics = [], scalar_prefetch = 0 : i64, scratch_operands = 0 : i64, tpu.core_type = #tpu.core_type<tc>} {
    %c0 = arith.constant 0 : index
    %c0_0 = arith.constant 0 : index
    %0 = vector.load %arg0[%c0, %c0_0] : memref<2x400xf32, #tpu.memory_space<vmem>>, vector<2x400xf32>
    %c0_1 = arith.constant 0 : index
    %c0_2 = arith.constant 0 : index
    %1 = vector.load %arg1[%c0_1, %c0_2] : memref<2x400xf32, #tpu.memory_space<vmem>>, vector<2x400xf32>
    %cst = arith.constant dense<0.000000e+00> : vector<2x2xf32>
    %2 = tpu.matmul %0, %1, %cst {dimension_numbers = #tpu.dot_dimension_numbers<[1], [1], [0], [0], [0, 0, 1, 0], [], []>} : vector<2x400xf32>, vector<2x400xf32>, vector<2x2xf32> -> vector<2x2xf32>
    %3 = tpu.iota {dimensions = array<i32: 1>} : vector<2x2xi32>
    %c1 = arith.constant 1 : index
    %4 = memref.load %arg2[%c1] : memref<2xf32, #tpu.memory_space<smem>>
    %5 = vector.broadcast %4 : f32 to vector<2x2xf32>
    %c0_i32 = arith.constant 0 : i32
    %6 = vector.broadcast %c0_i32 : i32 to vector<2x2xi32>
    %7 = arith.cmpi eq, %3, %6 : vector<2x2xi32>
    %c0_3 = arith.constant 0 : index
    %8 = memref.load %arg2[%c0_3] : memref<2xf32, #tpu.memory_space<smem>>
    %9 = vector.broadcast %8 : f32 to vector<2x2xf32>
    %10 = arith.select %7, %9, %5 : vector<2x2xi1>, vector<2x2xf32>
    %11 = arith.addf %2, %10 : vector<2x2xf32>
    %cst_4 = arith.constant 0.000000e+00 : f32
    %12 = vector.broadcast %cst_4 : f32 to vector<2x2xf32>
    %13 = arith.maximumf %11, %12 : vector<2x2xf32>
    %c0_5 = arith.constant 0 : index
    %c0_6 = arith.constant 0 : index
    %14 = vector.load %arg3[%c0_5, %c0_6] : memref<2x2xf32, #tpu.memory_space<vmem>>, vector<2x2xf32>
    tpu.vector_store %arg3[%c0_5, %c0_6], %13 {strides = array<i32>} : memref<2x2xf32, #tpu.memory_space<vmem>>, vector<2x2xf32>,
    return
  }
}

</mosaic_0001>

<llo_original>
// kernel: teacher_forward.1
$region0: #{teacher_forward.1}
  #allocation0 [shape = 'u32[]', space=smem, size = 0x4, offset = 0x4, fixed_abs, tag = 'smem constant byte address 0x4 - core index']
  #allocation1 [shape = 'u32[72,128]{1,0:T(1,128)}', space=vmem, size = 0x9000, scoped, tag = 'internal scratch']
  %s0 = inlined_call_operand.hbm [shape: f32[2,400], index: 0, kind: input, shape index: {}]
  %s1 = inlined_call_operand.hbm [shape: f32[2,400], index: 1, kind: input, shape index: {}]
  %s2 = inlined_call_operand.vmem [shape: f32[2], index: 2, kind: input, shape index: {}]
  %s3 = inlined_call_operand.hbm [shape: f32[2,2], index: 3, kind: output, shape index: {}]
  %s4 = sld [smem:[#allocation0]]
  $region34: #{teacher_forward.1} parent=0
    _
  %s6 = ssub.s32 1, %s4
  %s7 = scalar_select 0, %s6, %s4
  $region1: #{teacher_forward.1} parent=0
    #allocation2 [shape = 'u8[4096]{0}', space=vmem, size = 0x1000, scoped, tag = 'input window, operand 0, single buffered']
    #allocation3 [shape = 's32[1]{0}', space=sflag, size = 0x4, scoped, tag = 'scoped memory for teacher_forward.1']
    #allocation4 [shape = 's32[1]{0}', space=sflag, size = 0x4, scoped, tag = 'scoped memory for teacher_forward.1']
    #allocation5 [shape = 's32[1]{0}', space=sflag, size = 0x4, scoped, tag = 'scoped memory for teacher_forward.1']
    #allocation6 [shape = 'u8[4096]{0}', space=vmem, size = 0x1000, scoped, tag = 'input window, operand 1, single buffered']
    #allocation7 [shape = 's32[1]{0}', space=sflag, size = 0x4, scoped, tag = 'scoped memory for teacher_forward.1']
    #allocation8 [shape = 'u8[512]{0}', space=smem, size = 0x200, scoped, tag = 'input window, operand 2, single buffered']
    #allocation9 [shape = 'u8[1024]{0}', space=vmem, size = 0x400, scoped, tag = 'output window, operand 0, single buffered']
    %8 = vsyncpa [#allocation3], 0
    %9 = vsyncpa [#allocation7], 0
    %10 = vsyncpa [#allocation5], 0
    %11 = vsyncpa [#allocation4], 0
    // Predicated region
    $region2: #{teacher_forward.1} parent=1 // pred_check
      _
    $region3: #{teacher_forward.1} parent=1 // pred_check_branch
      %13 = sbr.rel (0) target = $region5
    $region4: #{teacher_forward.1} parent=1 // pred_region
      %15 = vsyncadd [#allocation3], 0
      %s17 = sshll.u32 %s0, 4
      %s18 = int_to_ptr.hbm [resolvable:$true] %s17
      %s19 = sshll.u32 [#allocation2], 4
      %s20 = int_to_ptr.vmem [resolvable:$true] %s19
      %22 = dma.hbm_to_vmem [thread:$0]  %s18, 128, %s20, [#allocation3]
    $region5: #{teacher_forward.1} parent=1 // pred_fallthru
      _
    // Predicated region
    $region6: #{teacher_forward.1} parent=1 // pred_check
      _
    $region7: #{teacher_forward.1} parent=1 // pred_check_branch
      %24 = sbr.rel (0) target = $region9
    $region8: #{teacher_forward.1} parent=1 // pred_region
      %26 = vsyncadd [#allocation7], 0
      %s28 = sshll.u32 %s1, 4
      %s29 = int_to_ptr.hbm [resolvable:$true] %s28
      %s30 = sshll.u32 [#allocation6], 4
      %s31 = int_to_ptr.vmem [resolvable:$true] %s30
      %33 = dma.hbm_to_vmem [thread:$0]  %s29, 128, %s31, [#allocation7]
    $region9: #{teacher_forward.1} parent=1 // pred_fallthru
      _
    // Predicated region
    $region10: #{teacher_forward.1} parent=1 // pred_check
      _
    $region11: #{teacher_forward.1} parent=1 // pred_check_branch
      %35 = sbr.rel (0) target = $region13
    $region12: #{teacher_forward.1} parent=1 // pred_region
      %37 = vsyncadd [#allocation5], 0
      %s39 = sshll.u32 %s2, 4
      %s40 = int_to_ptr.vmem [resolvable:$true] %s39
      %42 = dma.vmem_to_smem %s40, 16, [#allocation8], [#allocation5]
    $region13: #{teacher_forward.1} parent=1 // pred_fallthru
      _
    // Predicated region
    $region14: #{teacher_forward.1} parent=1 // pred_check
      _
    $region15: #{teacher_forward.1} parent=1 // pred_check_branch
      %44 = sbr.rel (0) target = $region17
    $region16: #{teacher_forward.1} parent=1 // pred_region
      %46 = dma.done [#allocation3], 128
    $region17: #{teacher_forward.1} parent=1 // pred_fallthru
      _
    // Predicated region
    $region18: #{teacher_forward.1} parent=1 // pred_check
      _
    $region19: #{teacher_forward.1} parent=1 // pred_check_branch
      %48 = sbr.rel (0) target = $region21
    $region20: #{teacher_forward.1} parent=1 // pred_region
      %50 = dma.done [#allocation7], 128
    $region21: #{teacher_forward.1} parent=1 // pred_fallthru
      _
    // Predicated region
    $region22: #{teacher_forward.1} parent=1 // pred_check
      _
    $region23: #{teacher_forward.1} parent=1 // pred_check_branch
      %52 = sbr.rel (0) target = $region25
    $region24: #{teacher_forward.1} parent=1 // pred_region
      %54 = dma.done [#allocation5], 16
    $region25: #{teacher_forward.1} parent=1 // pred_fallthru
      _
    %55 = sfence
    %v56 = vld [vmem:[#allocation2] sm:$0xff]
    %v57 = vld [vmem:[#allocation6] sm:$0xff]
    %v58 = vlaneseq
    %v59 = vand.u32 %v58, 127
    %s60 = sld [smem:[#allocation8 + $0x1]]
    %v61 = vstv %s60
    %vm62 = vcmp.eq.s32.totalorder %v59, 0
    %s63 = sld [smem:[#allocation8]]
    %v64 = vstv %s63
    %v65 = vsel %vm62, %v64, %v61
    %67 = vst [vmem:[#allocation1] ss:$4 sm:$0xff] %v56
    %v68 = vld.sshfl [vmem:[#allocation1] sm:$0xff pattern:$0x73625140]
    %v69 = vld.sshfl [vmem:[#allocation1 + $0x8] sm:$0xff pattern:$0x73625140]
    %v70 = vld.sshfl [vmem:[#allocation1 + $0x10] sm:$0xff pattern:$0x73625140]
    %v71 = vld.sshfl [vmem:[#allocation1 + $0x18] sm:$0xff pattern:$0x73625140]
    %76 = vst [vmem:[#allocation1] ss:$4 sm:$0xff] %v57
    %v77 = vld.sshfl [vmem:[#allocation1] sm:$0xff pattern:$0x73625140]
    %v78 = vld.sshfl [vmem:[#allocation1 + $0x8] sm:$0xff pattern:$0x73625140]
    %v79 = vld.sshfl [vmem:[#allocation1 + $0x10] sm:$0xff pattern:$0x73625140]
    %v80 = vld.sshfl [vmem:[#allocation1 + $0x18] sm:$0xff pattern:$0x73625140]
    %vm84 = vcmask 130048
    %v85 = vsel %vm84, %v71, 0
    %v87 = vsel %vm84, %v80, 0
    %89 = vmatpush.xpose.msra.mxu0 0.0
    %90 = vmatpush.xpose.msra.mxu0 0.0
    %91 = vmatpush.xpose.msra.mxu0 0.0
    %92 = vmatpush.xpose.msra.mxu0 0.0
    %93 = vmatpush.xpose.msra.mxu0 0.0
    %94 = vmatpush.xpose.msra.mxu0 0.0
    %95 = vmatpush.xpose.msra.mxu0 0.0
    %96 = vmatpush.xpose.msra.mxu0 0.0
    %97 = vmatpush.xpose.msra.mxu0 0.0
    %98 = vmatpush.xpose.msra.mxu0 0.0
    %99 = vmatpush.xpose.msra.mxu0 0.0
    %100 = vmatpush.xpose.msra.mxu0 0.0
    %101 = vmatpush.xpose.msra.mxu0 0.0
    %102 = vmatpush.xpose.msra.mxu0 0.0
    %103 = vmatpush.xpose.msra.mxu0 0.0
    %104 = vmatpush.xpose.msra.mxu0 %v77
    %105 = vmatmul.f32.gmra.mxu0 %v68
    %v106 = vpop.f32.mrf.mxu0
    %v107 = vadd.f32 %v65, %v106
    %108 = vdwg.mxu0
    %109 = vmatpush.xpose.msra.mxu0 0.0
    %110 = vmatpush.xpose.msra.mxu0 0.0
    %111 = vmatpush.xpose.msra.mxu0 0.0
    %112 = vmatpush.xpose.msra.mxu0 0.0
    %113 = vmatpush.xpose.msra.mxu0 0.0
    %114 = vmatpush.xpose.msra.mxu0 0.0
    %115 = vmatpush.xpose.msra.mxu0 0.0
    %116 = vmatpush.xpose.msra.mxu0 0.0
    %117 = vmatpush.xpose.msra.mxu0 0.0
    %118 = vmatpush.xpose.msra.mxu0 0.0
    %119 = vmatpush.xpose.msra.mxu0 0.0
    %120 = vmatpush.xpose.msra.mxu0 0.0
    %121 = vmatpush.xpose.msra.mxu0 0.0
    %122 = vmatpush.xpose.msra.mxu0 0.0
    %123 = vmatpush.xpose.msra.mxu0 0.0
    %124 = vmatpush.xpose.msra.mxu0 %v78
    %125 = vmatmul.f32.gmra.mxu0 %v69
    %v126 = vpop.f32.mrf.mxu0
    %v127 = vadd.f32 %v107, %v126
    %128 = vdwg.mxu0
    %129 = vmatpush.xpose.msra.mxu0 0.0
    %130 = vmatpush.xpose.msra.mxu0 0.0
    %131 = vmatpush.xpose.msra.mxu0 0.0
    %132 = vmatpush.xpose.msra.mxu0 0.0
    %133 = vmatpush.xpose.msra.mxu0 0.0
    %134 = vmatpush.xpose.msra.mxu0 0.0
    %135 = vmatpush.xpose.msra.mxu0 0.0
    %136 = vmatpush.xpose.msra.mxu0 0.0
    %137 = vmatpush.xpose.msra.mxu0 0.0
    %138 = vmatpush.xpose.msra.mxu0 0.0
    %139 = vmatpush.xpose.msra.mxu0 0.0
    %140 = vmatpush.xpose.msra.mxu0 0.0
    %141 = vmatpush.xpose.msra.mxu0 0.0
    %142 = vmatpush.xpose.msra.mxu0 0.0
    %143 = vmatpush.xpose.msra.mxu0 0.0
    %144 = vmatpush.xpose.msra.mxu0 %v79
    %145 = vmatmul.f32.gmra.mxu0 %v70
    %v146 = vpop.f32.mrf.mxu0
    %v147 = vadd.f32 %v127, %v146
    %148 = vdwg.mxu0
    %149 = vmatpush.xpose.msra.mxu0 0.0
    %150 = vmatpush.xpose.msra.mxu0 0.0
    %151 = vmatpush.xpose.msra.mxu0 0.0
    %152 = vmatpush.xpose.msra.mxu0 0.0
    %153 = vmatpush.xpose.msra.mxu0 0.0
    %154 = vmatpush.xpose.msra.mxu0 0.0
    %155 = vmatpush.xpose.msra.mxu0 0.0
    %156 = vmatpush.xpose.msra.mxu0 0.0
    %157 = vmatpush.xpose.msra.mxu0 0.0
    %158 = vmatpush.xpose.msra.mxu0 0.0
    %159 = vmatpush.xpose.msra.mxu0 0.0
    %160 = vmatpush.xpose.msra.mxu0 0.0
    %161 = vmatpush.xpose.msra.mxu0 0.0
    %162 = vmatpush.xpose.msra.mxu0 0.0
    %163 = vmatpush.xpose.msra.mxu0 0.0
    %164 = vmatpush.xpose.msra.mxu0 %v87
    %165 = vmatmul.f32.gmra.mxu0 %v85
    %v166 = vpop.f32.mrf.mxu0
    %v167 = vadd.f32 %v147, %v166
    %168 = vdwg.mxu0
    %v169 = vmax.f32 %v167, 0.0
    %vm170 = vcmask 9216
    %171 = vst.msk [vmem:[#allocation9] sm:$0x3] %vm170, %v169
    // Predicated region
    $region26: #{teacher_forward.1} parent=1 // pred_check
      _
    $region27: #{teacher_forward.1} parent=1 // pred_check_branch
      %173 = sbr.rel (0) target = $region29
    $region28: #{teacher_forward.1} parent=1 // pred_region
      %175 = vsyncadd [#allocation4], 0
      %s177 = sshll.u32 [#allocation9], 4
      %s178 = int_to_ptr.vmem [resolvable:$true] %s177
      %s179 = sshll.u32 %s3, 4
      %s180 = int_to_ptr.hbm [resolvable:$true] %s179
      %182 = dma.vmem_to_hbm [thread:$0]  %s178, 32, %s180, [#allocation4]
    $region29: #{teacher_forward.1} parent=1 // pred_fallthru
      _
    // Predicated region
    $region30: #{teacher_forward.1} parent=1 // pred_check
      _
    $region31: #{teacher_forward.1} parent=1 // pred_check_branch
      %184 = sbr.rel (0) target = $region33
    $region32: #{teacher_forward.1} parent=1 // pred_region
      %186 = dma.done [#allocation4], 32
    $region33: #{teacher_forward.1} parent=1 // pred_fallthru
      _
    %187 = vsyncpa [#allocation3], 1
    %188 = vsyncpa [#allocation7], 1
    %189 = vsyncpa [#allocation4], 1
    %190 = vsyncpa [#allocation5], 1

</llo_original>
